<compile_context>
chip_gen: v7x
topology: tpu7x:2x2x1
jax: 0.10.0
libtpu: 0.0.40
codegen_flags: <defaults>
</compile_context>

<pallas_src>
import functools

import jax
import jax.numpy as jnp
from jax.experimental import pallas as pl
from jax.experimental.pallas import tpu as pltpu


def _round_up(x, m):
    return ((x + m - 1) // m) * m


def _pad2(a, rows, cols):
    r, c = a.shape
    return jnp.pad(a, ((0, rows - r), (0, cols - c)))


def _mlp_noise_kernel(x_ref, noise_ref, w1_ref, scale_ref, shift_ref,
                      w2_ref, b2_ref, o_ref):
    # x + noise   (f32 on the VPU — safe on v5e which has no bf16 VALU path)
    h = x_ref[...] + noise_ref[...]

    # Linear(c_in -> H1, bias=False) on the MXU.  bf16 operands, f32 accumulate
    # (bf16-native MXU on v6e/v7x; f32 accumulation preserves accuracy).
    h1 = jnp.dot(h.astype(jnp.bfloat16), w1_ref[...],
                 preferred_element_type=jnp.float32)

    # BatchNorm1d(H1) folded to per-channel affine (eval mode), then ReLU (f32).
    h1 = h1 * scale_ref[...] + shift_ref[...]
    h1 = jnp.maximum(h1, 0.0)

    # Linear(H1 -> H2, bias=True), returned before activation (ret_before_act).
    out = jnp.dot(h1.astype(jnp.bfloat16), w2_ref[...],
                  preferred_element_type=jnp.float32) + b2_ref[...]
    o_ref[...] = out.astype(o_ref.dtype)


def mlp_random_noise(x, params, *, mean=0.0, std=0.1, tm=512, key=None):
    """x: [N, C_in] float32. Returns [N, H2] float32.

    Lane dims (c_in, H1, H2) are zero-padded to multiples of 128 and the row
    dim is padded to a multiple of the row tile `tm`, so all loads/stores are
    lane-dense (no masked vst) and the MXU sees well-shaped tiles.  Padding is
    sliced away after the pallas_call.
    """
    w1, bn_scale, bn_shift, w2, b2 = params
    N, c_in = x.shape
    h1 = w1.shape[1]
    h2 = w2.shape[1]

    if key is None:
        key = jax.random.PRNGKey(42)

    # Gaussian noise, same semantics as torch.randn_like(x) * std + mean.
    noise = jax.random.normal(key, (N, c_in), jnp.float32) * std + mean

    # ---- padding to TPU-friendly shapes -------------------------------------
    c_pad = _round_up(c_in, 128)
    h1_pad = _round_up(h1, 128)
    h2_pad = _round_up(h2, 128)

    # Row tile: as large as requested but never exceeding the (rounded) batch.
    tm = _round_up(max(8, min(tm, _round_up(N, 8))), 8)
    n_pad = _round_up(N, tm)

    x_p = _pad2(x, n_pad, c_pad)
    noise_p = _pad2(noise, n_pad, c_pad)
    # Weights as bf16 MXU operands; BN affine / bias stay f32.
    w1_p = _pad2(w1, c_pad, h1_pad).astype(jnp.bfloat16)
    w2_p = _pad2(w2, h1_pad, h2_pad).astype(jnp.bfloat16)
    scale_p = _pad2(bn_scale, 1, h1_pad)
    shift_p = _pad2(bn_shift, 1, h1_pad)
    b2_p = _pad2(b2, 1, h2_pad)

    grid = (n_pad // tm,)

    grid_spec = pltpu.PrefetchScalarGridSpec(
        num_scalar_prefetch=0,
        grid=grid,
        in_specs=[
            pl.BlockSpec((tm, c_pad), lambda i: (i, 0)),      # x tile
            pl.BlockSpec((tm, c_pad), lambda i: (i, 0)),      # noise tile
            pl.BlockSpec((c_pad, h1_pad), lambda i: (0, 0)),  # W1 (resident)
            pl.BlockSpec((1, h1_pad), lambda i: (0, 0)),      # BN scale
            pl.BlockSpec((1, h1_pad), lambda i: (0, 0)),      # BN shift
            pl.BlockSpec((h1_pad, h2_pad), lambda i: (0, 0)), # W2 (resident)
            pl.BlockSpec((1, h2_pad), lambda i: (0, 0)),      # b2
        ],
        out_specs=pl.BlockSpec((tm, h2_pad), lambda i: (i, 0)),
    )

    out_padded = pl.pallas_call(
        _mlp_noise_kernel,
        out_shape=jax.ShapeDtypeStruct((n_pad, h2_pad), jnp.float32),
        grid_spec=grid_spec,
        compiler_params=pltpu.CompilerParams(
            dimension_semantics=("parallel",),
            vmem_limit_bytes=64 * 1024 * 1024,
        ),
    )(x_p, noise_p, w1_p, scale_p, shift_p, w2_p, b2_p)

    return out_padded[:N, :h2]


def init_params(key, c_in, mlp_channels):
    """Deterministic synthetic params for
       Linear(c_in,H1,bias=False) + BatchNorm1d(H1) + ReLU + Linear(H1,H2,bias=True)."""
    h1, h2 = mlp_channels
    k1, k2, k3, k4, k5, k6, k7 = jax.random.split(key, 7)

    w1 = jax.random.normal(k1, (c_in, h1), jnp.float32) * 0.05

    gamma = 1.0 + 0.1 * jax.random.normal(k2, (h1,), jnp.float32)
    beta = 0.1 * jax.random.normal(k3, (h1,), jnp.float32)
    running_mean = 0.1 * jax.random.normal(k4, (h1,), jnp.float32)
    running_var = jax.random.uniform(k5, (h1,), jnp.float32, 0.5, 1.5)
    eps = 1e-5
    bn_scale = (gamma / jnp.sqrt(running_var + eps)).reshape(1, h1)
    bn_shift = (beta - running_mean * bn_scale[0]).reshape(1, h1)

    w2 = jax.random.normal(k6, (h1, h2), jnp.float32) * 0.05
    b2 = (0.01 * jax.random.normal(k7, (h2,), jnp.float32)).reshape(1, h2)

    return (w1, bn_scale, bn_shift, w2, b2)


if __name__ == "__main__":
    # Small module config (consistent with build_mlps):
    C_IN = 32
    MLP_CHANNELS = [64, 64]
    MEAN, STD = 0.0, 0.1
    N = 16  # batch

    key = jax.random.PRNGKey(0)
    kx, kp, kn = jax.random.split(key, 3)
    x = jax.random.normal(kx, (N, C_IN), jnp.float32)
    params = init_params(kp, C_IN, MLP_CHANNELS)

    out = mlp_random_noise(x, params, mean=MEAN, std=STD, tm=512, key=kn)
    out = jax.block_until_ready(out)

    assert out.shape == (N, MLP_CHANNELS[-1])
    assert bool(jnp.all(jnp.isfinite(out)))
    print("KERNEL_OK")
</pallas_src>

<mosaic_0001>
module attributes {stable_mosaic.version = 11 : i64} {
  func.func @_mlp_noise_kernel(%arg0: i32, %arg1: memref<16x128xf32, #tpu.memory_space<vmem>>, %arg2: memref<16x128xf32, #tpu.memory_space<vmem>>, %arg3: memref<128x128xbf16, #tpu.memory_space<vmem>>, %arg4: memref<1x128xf32, #tpu.memory_space<vmem>>, %arg5: memref<1x128xf32, #tpu.memory_space<vmem>>, %arg6: memref<128x128xbf16, #tpu.memory_space<vmem>>, %arg7: memref<1x128xf32, #tpu.memory_space<vmem>>, %arg8: memref<16x128xf32, #tpu.memory_space<vmem>>) attributes {dimension_semantics = [#tpu.dimension_semantics<parallel>], iteration_bounds = array<i64: 1>, scalar_prefetch = 0 : i64, scratch_operands = 0 : i64, tpu.core_type = #tpu.core_type<tc>, window_params = [{transform_indices = @transform_0, window_bounds = array<i64: 16, 128>}, {transform_indices = @transform_1, window_bounds = array<i64: 16, 128>}, {pipeline_mode = #tpu.pipeline_mode<synchronous>, transform_indices = @transform_2, window_bounds = array<i64: 128, 128>}, {pipeline_mode = #tpu.pipeline_mode<synchronous>, transform_indices = @transform_3, window_bounds = array<i64: 1, 128>}, {pipeline_mode = #tpu.pipeline_mode<synchronous>, transform_indices = @transform_4, window_bounds = array<i64: 1, 128>}, {pipeline_mode = #tpu.pipeline_mode<synchronous>, transform_indices = @transform_5, window_bounds = array<i64: 128, 128>}, {pipeline_mode = #tpu.pipeline_mode<synchronous>, transform_indices = @transform_6, window_bounds = array<i64: 1, 128>}, {transform_indices = @transform_7, window_bounds = array<i64: 16, 128>}]} {
    %c0 = arith.constant 0 : index
    %c0_0 = arith.constant 0 : index
    %0 = vector.load %arg1[%c0, %c0_0] : memref<16x128xf32, #tpu.memory_space<vmem>>, vector<16x128xf32>
    %c0_1 = arith.constant 0 : index
    %c0_2 = arith.constant 0 : index
    %1 = vector.load %arg2[%c0_1, %c0_2] : memref<16x128xf32, #tpu.memory_space<vmem>>, vector<16x128xf32>
    %2 = arith.addf %0, %1 : vector<16x128xf32>
    %3 = arith.truncf %2 : vector<16x128xf32> to vector<16x128xbf16>
    %c0_3 = arith.constant 0 : index
    %c0_4 = arith.constant 0 : index
    %4 = vector.load %arg3[%c0_3, %c0_4] : memref<128x128xbf16, #tpu.memory_space<vmem>>, vector<128x128xbf16>
    %cst = arith.constant dense<0.000000e+00> : vector<16x128xf32>
    %5 = tpu.matmul %3, %4, %cst {dimension_numbers = #tpu.dot_dimension_numbers<[1], [0], [0], [1], [0, 0, 1, 1], [], []>} : vector<16x128xbf16>, vector<128x128xbf16>, vector<16x128xf32> -> vector<16x128xf32>
    %c0_5 = arith.constant 0 : index
    %c0_6 = arith.constant 0 : index
    %6 = vector.load %arg4[%c0_5, %c0_6] : memref<1x128xf32, #tpu.memory_space<vmem>>, vector<1x128xf32>
    %7 = vector.broadcast %6 : vector<1x128xf32> to vector<16x128xf32>
    %8 = arith.mulf %5, %7 : vector<16x128xf32>
    %c0_7 = arith.constant 0 : index
    %c0_8 = arith.constant 0 : index
    %9 = vector.load %arg5[%c0_7, %c0_8] : memref<1x128xf32, #tpu.memory_space<vmem>>, vector<1x128xf32>
    %10 = vector.broadcast %9 : vector<1x128xf32> to vector<16x128xf32>
    %11 = arith.addf %8, %10 : vector<16x128xf32>
    %cst_9 = arith.constant 0.000000e+00 : f32
    %12 = vector.broadcast %cst_9 : f32 to vector<16x128xf32>
    %13 = arith.maximumf %11, %12 : vector<16x128xf32>
    %14 = arith.truncf %13 : vector<16x128xf32> to vector<16x128xbf16>
    %c0_10 = arith.constant 0 : index
    %c0_11 = arith.constant 0 : index
    %15 = vector.load %arg6[%c0_10, %c0_11] : memref<128x128xbf16, #tpu.memory_space<vmem>>, vector<128x128xbf16>
    %cst_12 = arith.constant dense<0.000000e+00> : vector<16x128xf32>
    %16 = tpu.matmul %14, %15, %cst_12 {dimension_numbers = #tpu.dot_dimension_numbers<[1], [0], [0], [1], [0, 0, 1, 1], [], []>} : vector<16x128xbf16>, vector<128x128xbf16>, vector<16x128xf32> -> vector<16x128xf32>
    %c0_13 = arith.constant 0 : index
    %c0_14 = arith.constant 0 : index
    %17 = vector.load %arg7[%c0_13, %c0_14] : memref<1x128xf32, #tpu.memory_space<vmem>>, vector<1x128xf32>
    %18 = vector.broadcast %17 : vector<1x128xf32> to vector<16x128xf32>
    %19 = arith.addf %16, %18 : vector<16x128xf32>
    %c0_15 = arith.constant 0 : index
    %c0_16 = arith.constant 0 : index
    %20 = vector.load %arg8[%c0_15, %c0_16] : memref<16x128xf32, #tpu.memory_space<vmem>>, vector<16x128xf32>
    tpu.vector_store %arg8[%c0_15, %c0_16], %19 {strides = array<i32>} : memref<16x128xf32, #tpu.memory_space<vmem>>, vector<16x128xf32>,
    return
  }
  func.func @transform_0(%arg0: i32) -> (i32, i32) {
    %c0_i32 = arith.constant 0 : i32
    %c0_i32_0 = arith.constant 0 : i32
    return %arg0, %c0_i32 : i32, i32
  }
  func.func @transform_1(%arg0: i32) -> (i32, i32) {
    %c0_i32 = arith.constant 0 : i32
    %c0_i32_0 = arith.constant 0 : i32
    return %arg0, %c0_i32 : i32, i32
  }
  func.func @transform_2(%arg0: i32) -> (i32, i32) {
    %c0_i32 = arith.constant 0 : i32
    %c0_i32_0 = arith.constant 0 : i32
    %c0_i32_1 = arith.constant 0 : i32
    return %c0_i32, %c0_i32_0 : i32, i32
  }
  func.func @transform_3(%arg0: i32) -> (i32, i32) {
    %c0_i32 = arith.constant 0 : i32
    %c0_i32_0 = arith.constant 0 : i32
    %c0_i32_1 = arith.constant 0 : i32
    return %c0_i32, %c0_i32_0 : i32, i32
  }
  func.func @transform_4(%arg0: i32) -> (i32, i32) {
    %c0_i32 = arith.constant 0 : i32
    %c0_i32_0 = arith.constant 0 : i32
    %c0_i32_1 = arith.constant 0 : i32
    return %c0_i32, %c0_i32_0 : i32, i32
  }
  func.func @transform_5(%arg0: i32) -> (i32, i32) {
    %c0_i32 = arith.constant 0 : i32
    %c0_i32_0 = arith.constant 0 : i32
    %c0_i32_1 = arith.constant 0 : i32
    return %c0_i32, %c0_i32_0 : i32, i32
  }
  func.func @transform_6(%arg0: i32) -> (i32, i32) {
    %c0_i32 = arith.constant 0 : i32
    %c0_i32_0 = arith.constant 0 : i32
    %c0_i32_1 = arith.constant 0 : i32
    return %c0_i32, %c0_i32_0 : i32, i32
  }
  func.func @transform_7(%arg0: i32) -> (i32, i32) {
    %c0_i32 = arith.constant 0 : i32
    %c0_i32_0 = arith.constant 0 : i32
    return %arg0, %c0_i32 : i32, i32
  }
}

</mosaic_0001>

<llo_original>
// kernel: tpu_custom_call.1
$region0: #{tpu_custom_call.1}
  #allocation0 [shape = 'u32[]', space=smem, size = 0x4, offset = 0x4, fixed_abs, tag = 'smem constant byte address 0x4 - core index']
  #allocation1 [shape = 'u32[144,128]{1,0:T(1,128)}', space=vmem, size = 0x12000, scoped, tag = 'internal scratch']
  %s0 = inlined_call_operand.hbm [shape: f32[16,128], index: 0, kind: input, shape index: {}]
  %s1 = inlined_call_operand.hbm [shape: f32[16,128], index: 1, kind: input, shape index: {}]
  %s2 = inlined_call_operand.hbm [shape: bf16[128,128], index: 2, kind: input, shape index: {}]
  %s3 = inlined_call_operand.hbm [shape: f32[1,128], index: 3, kind: input, shape index: {}]
  %s4 = inlined_call_operand.hbm [shape: f32[1,128], index: 4, kind: input, shape index: {}]
  %s5 = inlined_call_operand.hbm [shape: bf16[128,128], index: 5, kind: input, shape index: {}]
  %s6 = inlined_call_operand.hbm [shape: f32[1,128], index: 6, kind: input, shape index: {}]
  %s7 = inlined_call_operand.hbm [shape: f32[16,128], index: 7, kind: output, shape index: {}]
  %s8 = sld [smem:[#allocation0]]
  $region66: #{tpu_custom_call.1} parent=0
    _
  %s10 = ssub.s32 1, %s8
  %s11 = scalar_select 0, %s10, %s8
  $region1: #{tpu_custom_call.1} parent=0
    #allocation2 [shape = 'u8[8192]{0}', space=vmem, size = 0x2000, scoped, tag = 'input window, operand 0, single buffered']
    #allocation3 [shape = 's32[1]{0}', space=sflag, size = 0x4, scoped, tag = 'scoped memory for tpu_custom_call.1']
    #allocation4 [shape = 's32[1]{0}', space=sflag, size = 0x4, scoped, tag = 'scoped memory for tpu_custom_call.1']
    #allocation5 [shape = 'u8[8192]{0}', space=vmem, size = 0x2000, scoped, tag = 'input window, operand 1, single buffered']
    #allocation6 [shape = 's32[1]{0}', space=sflag, size = 0x4, scoped, tag = 'scoped memory for tpu_custom_call.1']
    #allocation7 [shape = 'u8[32768]{0}', space=vmem, size = 0x8000, scoped, tag = 'input window, operand 2, single buffered']
    #allocation8 [shape = 'u8[512]{0}', space=vmem, size = 0x400, scoped, tag = 'input window, operand 3, single buffered']
    #allocation9 [shape = 's32[1]{0}', space=sflag, size = 0x4, scoped, tag = 'scoped memory for tpu_custom_call.1']
    #allocation10 [shape = 'u8[512]{0}', space=vmem, size = 0x400, scoped, tag = 'input window, operand 4, single buffered']
    #allocation11 [shape = 'u8[32768]{0}', space=vmem, size = 0x8000, scoped, tag = 'input window, operand 5, single buffered']
    #allocation12 [shape = 's32[1]{0}', space=sflag, size = 0x4, scoped, tag = 'scoped memory for tpu_custom_call.1']
    #allocation13 [shape = 'u8[512]{0}', space=vmem, size = 0x400, scoped, tag = 'input window, operand 6, single buffered']
    #allocation14 [shape = 'u8[8192]{0}', space=vmem, size = 0x2000, scoped, tag = 'output window, operand 0, single buffered']
    %12 = vsyncpa [#allocation3], 0
    %13 = vsyncpa [#allocation6], 0
    %14 = vsyncpa [#allocation9], 0
    %15 = vsyncpa [#allocation12], 0
    %16 = vsyncpa [#allocation4], 0
    // Predicated region
    $region2: #{tpu_custom_call.1} parent=1 // pred_check
      _
    $region3: #{tpu_custom_call.1} parent=1 // pred_check_branch
      %18 = sbr.rel (0) target = $region5
    $region4: #{tpu_custom_call.1} parent=1 // pred_region
      %s20 = ssub.s32 256, 256
      %21 = vsyncadd [#allocation3], %s20
      %s22 = sshll.u32 [#allocation2], 4
      %s23 = int_to_ptr.vmem [resolvable:$true] %s22
      %28 = dma.hbm_to_vmem [thread:$0]  %s0, 256, %s23, [#allocation3], 128, 128, 8
    $region5: #{tpu_custom_call.1} parent=1 // pred_fallthru
      _
    // Predicated region
    $region6: #{tpu_custom_call.1} parent=1 // pred_check
      _
    $region7: #{tpu_custom_call.1} parent=1 // pred_check_branch
      %30 = sbr.rel (0) target = $region9
    $region8: #{tpu_custom_call.1} parent=1 // pred_region
      %s32 = ssub.s32 256, 256
      %33 = vsyncadd [#allocation6], %s32
      %s34 = sshll.u32 [#allocation5], 4
      %s35 = int_to_ptr.vmem [resolvable:$true] %s34
      %40 = dma.hbm_to_vmem [thread:$0]  %s1, 256, %s35, [#allocation6], 128, 128, 8
    $region9: #{tpu_custom_call.1} parent=1 // pred_fallthru
      _
    // Predicated region
    $region10: #{tpu_custom_call.1} parent=1 // pred_check
      _
    $region11: #{tpu_custom_call.1} parent=1 // pred_check_branch
      %42 = sbr.rel (0) target = $region13
    $region12: #{tpu_custom_call.1} parent=1 // pred_region
      %s44 = ssub.s32 1024, 1024
      %45 = vsyncadd [#allocation6], %s44
      %s46 = sshll.u32 [#allocation7], 4
      %s47 = int_to_ptr.vmem [resolvable:$true] %s46
      %52 = dma.hbm_to_vmem [thread:$0]  %s2, 1024, %s47, [#allocation6], 64, 64, 4
    $region13: #{tpu_custom_call.1} parent=1 // pred_fallthru
      _
    // Predicated region
    $region14: #{tpu_custom_call.1} parent=1 // pred_check
      _
    $region15: #{tpu_custom_call.1} parent=1 // pred_check_branch
      %54 = sbr.rel (0) target = $region17
    $region16: #{tpu_custom_call.1} parent=1 // pred_region
      %s56 = ssub.s32 16, 16
      %57 = vsyncadd [#allocation9], %s56
      %s59 = sshll.u32 [#allocation8], 4
      %s60 = int_to_ptr.vmem [resolvable:$true] %s59
      %62 = dma.hbm_to_vmem [thread:$0]  %s3, 16, %s60, [#allocation9]
    $region17: #{tpu_custom_call.1} parent=1 // pred_fallthru
      _
    // Predicated region
    $region18: #{tpu_custom_call.1} parent=1 // pred_check
      _
    $region19: #{tpu_custom_call.1} parent=1 // pred_check_branch
      %64 = sbr.rel (0) target = $region21
    $region20: #{tpu_custom_call.1} parent=1 // pred_region
      %s66 = ssub.s32 16, 16
      %67 = vsyncadd [#allocation9], %s66
      %s69 = sshll.u32 [#allocation10], 4
      %s70 = int_to_ptr.vmem [resolvable:$true] %s69
      %72 = dma.hbm_to_vmem [thread:$0]  %s4, 16, %s70, [#allocation9]
    $region21: #{tpu_custom_call.1} parent=1 // pred_fallthru
      _
    // Predicated region
    $region22: #{tpu_custom_call.1} parent=1 // pred_check
      _
    $region23: #{tpu_custom_call.1} parent=1 // pred_check_branch
      %74 = sbr.rel (0) target = $region25
    $region24: #{tpu_custom_call.1} parent=1 // pred_region
      %s76 = ssub.s32 1024, 1024
      %77 = vsyncadd [#allocation12], %s76
      %s78 = sshll.u32 [#allocation11], 4
      %s79 = int_to_ptr.vmem [resolvable:$true] %s78
      %84 = dma.hbm_to_vmem [thread:$0]  %s5, 1024, %s79, [#allocation12], 64, 64, 4
    $region25: #{tpu_custom_call.1} parent=1 // pred_fallthru
      _
    // Predicated region
    $region26: #{tpu_custom_call.1} parent=1 // pred_check
      _
    $region27: #{tpu_custom_call.1} parent=1 // pred_check_branch
      %86 = sbr.rel (0) target = $region29
    $region28: #{tpu_custom_call.1} parent=1 // pred_region
      %s88 = ssub.s32 16, 16
      %89 = vsyncadd [#allocation12], %s88
      %s91 = sshll.u32 [#allocation13], 4
      %s92 = int_to_ptr.vmem [resolvable:$true] %s91
      %94 = dma.hbm_to_vmem [thread:$0]  %s6, 16, %s92, [#allocation12]
    $region29: #{tpu_custom_call.1} parent=1 // pred_fallthru
      _
    // Predicated region
    $region30: #{tpu_custom_call.1} parent=1 // pred_check
      _
    $region31: #{tpu_custom_call.1} parent=1 // pred_check_branch
      %96 = sbr.rel (0) target = $region33
    $region32: #{tpu_custom_call.1} parent=1 // pred_region
      %97 = dma.done [#allocation3], 256
    $region33: #{tpu_custom_call.1} parent=1 // pred_fallthru
      _
    // Predicated region
    $region34: #{tpu_custom_call.1} parent=1 // pred_check
      _
    $region35: #{tpu_custom_call.1} parent=1 // pred_check_branch
      %99 = sbr.rel (0) target = $region37
    $region36: #{tpu_custom_call.1} parent=1 // pred_region
      %100 = dma.done [#allocation6], 256
    $region37: #{tpu_custom_call.1} parent=1 // pred_fallthru
      _
    // Predicated region
    $region38: #{tpu_custom_call.1} parent=1 // pred_check
      _
    $region39: #{tpu_custom_call.1} parent=1 // pred_check_branch
      %102 = sbr.rel (0) target = $region41
    $region40: #{tpu_custom_call.1} parent=1 // pred_region
      %103 = dma.done [#allocation6], 1024
    $region41: #{tpu_custom_call.1} parent=1 // pred_fallthru
      _
    // Predicated region
    $region42: #{tpu_custom_call.1} parent=1 // pred_check
      _
    $region43: #{tpu_custom_call.1} parent=1 // pred_check_branch
      %105 = sbr.rel (0) target = $region45
    $region44: #{tpu_custom_call.1} parent=1 // pred_region
      %106 = dma.done [#allocation9], 16
    $region45: #{tpu_custom_call.1} parent=1 // pred_fallthru
      _
    // Predicated region
    $region46: #{tpu_custom_call.1} parent=1 // pred_check
      _
    $region47: #{tpu_custom_call.1} parent=1 // pred_check_branch
      %108 = sbr.rel (0) target = $region49
    $region48: #{tpu_custom_call.1} parent=1 // pred_region
      %109 = dma.done [#allocation9], 16
    $region49: #{tpu_custom_call.1} parent=1 // pred_fallthru
      _
    // Predicated region
    $region50: #{tpu_custom_call.1} parent=1 // pred_check
      _
    $region51: #{tpu_custom_call.1} parent=1 // pred_check_branch
      %111 = sbr.rel (0) target = $region53
    $region52: #{tpu_custom_call.1} parent=1 // pred_region
      %112 = dma.done [#allocation12], 1024
    $region53: #{tpu_custom_call.1} parent=1 // pred_fallthru
      _
    // Predicated region
    $region54: #{tpu_custom_call.1} parent=1 // pred_check
      _
    $region55: #{tpu_custom_call.1} parent=1 // pred_check_branch
      %114 = sbr.rel (0) target = $region57
    $region56: #{tpu_custom_call.1} parent=1 // pred_region
      %115 = dma.done [#allocation12], 16
    $region57: #{tpu_custom_call.1} parent=1 // pred_fallthru
      _
    %v117 = vld [vmem:[#allocation2] sm:$0xff]
    %v118 = vld [vmem:[#allocation2 + $0x8] sm:$0xff]
    %v119 = vld [vmem:[#allocation5] sm:$0xff]
    %v120 = vld [vmem:[#allocation5 + $0x8] sm:$0xff]
    %v121 = vadd.f32 %v117, %v119
    %v122 = vadd.f32 %v118, %v120
    %v123 = vpack.c.bf16 %v122, %v121
    %v124 = vld [vmem:[#allocation7] sm:$0xf]
    %v125 = vld [vmem:[#allocation7 + $0x4] sm:$0xf]
    %v126 = vld [vmem:[#allocation7 + $0x8] sm:$0xf]
    %v127 = vld [vmem:[#allocation7 + $0xc] sm:$0xf]
    %v128 = vld [vmem:[#allocation7 + $0x10] sm:$0xf]
    %v129 = vld [vmem:[#allocation7 + $0x14] sm:$0xf]
    %v130 = vld [vmem:[#allocation7 + $0x18] sm:$0xf]
    %v131 = vld [vmem:[#allocation7 + $0x1c] sm:$0xf]
    %v132 = vld [vmem:[#allocation7 + $0x20] sm:$0xf]
    %v133 = vld [vmem:[#allocation7 + $0x24] sm:$0xf]
    %v134 = vld [vmem:[#allocation7 + $0x28] sm:$0xf]
    %v135 = vld [vmem:[#allocation7 + $0x2c] sm:$0xf]
    %v136 = vld [vmem:[#allocation7 + $0x30] sm:$0xf]
    %v137 = vld [vmem:[#allocation7 + $0x34] sm:$0xf]
    %v138 = vld [vmem:[#allocation7 + $0x38] sm:$0xf]
    %v139 = vld [vmem:[#allocation7 + $0x3c] sm:$0xf]
    %v156 = vunpack.c.l.b16 %v124
    %v157 = vunpack.c.l.b16 %v125
    %v158 = vunpack.c.l.b16 %v126
    %v159 = vunpack.c.l.b16 %v127
    %v160 = vunpack.c.l.b16 %v128
    %v161 = vunpack.c.l.b16 %v129
    %v162 = vunpack.c.l.b16 %v130
    %v163 = vunpack.c.l.b16 %v131
    %v164 = vunpack.c.l.b16 %v132
    %v165 = vunpack.c.l.b16 %v133
    %v166 = vunpack.c.l.b16 %v134
    %v167 = vunpack.c.l.b16 %v135
    %v168 = vunpack.c.l.b16 %v136
    %v169 = vunpack.c.l.b16 %v137
    %v170 = vunpack.c.l.b16 %v138
    %v171 = vunpack.c.l.b16 %v139
    %v172 = vpack.c.b16 %v157, %v156
    %v173 = vpack.c.b16 %v159, %v158
    %v174 = vpack.c.b16 %v161, %v160
    %v175 = vpack.c.b16 %v163, %v162
    %v176 = vpack.c.b16 %v165, %v164
    %v177 = vpack.c.b16 %v167, %v166
    %v178 = vpack.c.b16 %v169, %v168
    %v179 = vpack.c.b16 %v171, %v170
    %188 = vmatprep.subr.bf16.mxu0 0
    %189 = vmatpush1.bf16.msra.mxu0 %v172
    %190 = vmatprep.subr.bf16.mxu0 0
    %191 = vmatpush1.bf16.msra.mxu0 %v173
    %192 = vmatprep.subr.bf16.mxu0 0
    %193 = vmatpush1.bf16.msra.mxu0 %v174
    %194 = vmatprep.subr.bf16.mxu0 0
    %195 = vmatpush1.bf16.msra.mxu0 %v175
    %196 = vmatprep.subr.bf16.mxu0 0
    %197 = vmatpush1.bf16.msra.mxu0 %v176
    %198 = vmatprep.subr.bf16.mxu0 0
    %199 = vmatpush1.bf16.msra.mxu0 %v177
    %200 = vmatprep.subr.bf16.mxu0 0
    %201 = vmatpush1.bf16.msra.mxu0 %v178
    %202 = vmatprep.subr.bf16.mxu0 0
    %203 = vmatpush1.bf16.msra.mxu0 %v179
    %204 = vmatprep.subr.bf16.mxu0 0
    %205 = vmatpush1.bf16.msra.mxu0 0
    %206 = vmatprep.subr.bf16.mxu0 0
    %207 = vmatpush1.bf16.msra.mxu0 0
    %208 = vmatprep.subr.bf16.mxu0 0
    %209 = vmatpush1.bf16.msra.mxu0 0
    %210 = vmatprep.subr.bf16.mxu0 0
    %211 = vmatpush1.bf16.msra.mxu0 0
    %212 = vmatprep.subr.bf16.mxu0 0
    %213 = vmatpush1.bf16.msra.mxu0 0
    %214 = vmatprep.subr.bf16.mxu0 0
    %215 = vmatpush1.bf16.msra.mxu0 0
    %216 = vmatprep.subr.bf16.mxu0 0
    %217 = vmatpush1.bf16.msra.mxu0 0
    %218 = vmatprep.subr.bf16.mxu0 0
    %219 = vmatpush1.bf16.msra.mxu0 0
    %220 = vmatprep.mubr.bf16.mxu0 0
    %221 = vmatmul.mubr.bf16.gmra.mrb[0].mxu0 %v123
    %v222 = vpop.f32.mrb[0].mxu0
    %v223 = vadd.f32 0.0, %v222
    %v224 = vpop.f32.mrb[0].mxu0
    %v225 = vpop.f32.mrb[0].mxu0
    %v226 = vadd.f32 0.0, %v225
    %v227 = vpop.f32.mrb[0].mxu0
    %228 = vdwg.mxu0
    %v229 = vld [vmem:[#allocation8] sm:$0x1]
    %v231 = vlaneseq
    %v232 = vshrl.u32 %v231, 7
    %v233 = vsub.s32 0, %v232
    %v234 = vrot.slane %v229, %v233
    %v236 = vmul.f32 %v223, %v234
    %v237 = vmul.f32 %v226, %v234
    %v238 = vld [vmem:[#allocation10] sm:$0x1]
    %v240 = vlaneseq
    %v241 = vshrl.u32 %v240, 7
    %v242 = vsub.s32 0, %v241
    %v243 = vrot.slane %v238, %v242
    %v245 = vadd.f32 %v236, %v243
    %v246 = vadd.f32 %v237, %v243
    %v247 = vmax.f32 %v245, 0.0
    %v248 = vmax.f32 %v246, 0.0
    %v249 = vpack.c.bf16 %v248, %v247
    %v250 = vld [vmem:[#allocation11] sm:$0xf]
    %v251 = vld [vmem:[#allocation11 + $0x4] sm:$0xf]
    %v252 = vld [vmem:[#allocation11 + $0x8] sm:$0xf]
    %v253 = vld [vmem:[#allocation11 + $0xc] sm:$0xf]
    %v254 = vld [vmem:[#allocation11 + $0x10] sm:$0xf]
    %v255 = vld [vmem:[#allocation11 + $0x14] sm:$0xf]
    %v256 = vld [vmem:[#allocation11 + $0x18] sm:$0xf]
    %v257 = vld [vmem:[#allocation11 + $0x1c] sm:$0xf]
    %v258 = vld [vmem:[#allocation11 + $0x20] sm:$0xf]
    %v259 = vld [vmem:[#allocation11 + $0x24] sm:$0xf]
    %v260 = vld [vmem:[#allocation11 + $0x28] sm:$0xf]
    %v261 = vld [vmem:[#allocation11 + $0x2c] sm:$0xf]
    %v262 = vld [vmem:[#allocation11 + $0x30] sm:$0xf]
    %v263 = vld [vmem:[#allocation11 + $0x34] sm:$0xf]
    %v264 = vld [vmem:[#allocation11 + $0x38] sm:$0xf]
    %v265 = vld [vmem:[#allocation11 + $0x3c] sm:$0xf]
    %v266 = vld [vmem:[#allocation13] sm:$0x1]
    %v268 = vlaneseq
    %v269 = vshrl.u32 %v268, 7
    %v270 = vsub.s32 0, %v269
    %v271 = vrot.slane %v266, %v270
    %v289 = vunpack.c.l.b16 %v250
    %v290 = vunpack.c.l.b16 %v251
    %v291 = vunpack.c.l.b16 %v252
    %v292 = vunpack.c.l.b16 %v253
    %v293 = vunpack.c.l.b16 %v254
    %v294 = vunpack.c.l.b16 %v255
    %v295 = vunpack.c.l.b16 %v256
    %v296 = vunpack.c.l.b16 %v257
    %v297 = vunpack.c.l.b16 %v258
    %v298 = vunpack.c.l.b16 %v259
    %v299 = vunpack.c.l.b16 %v260
    %v300 = vunpack.c.l.b16 %v261
    %v301 = vunpack.c.l.b16 %v262
    %v302 = vunpack.c.l.b16 %v263
    %v303 = vunpack.c.l.b16 %v264
    %v304 = vunpack.c.l.b16 %v265
    %v305 = vpack.c.b16 %v290, %v289
    %v306 = vpack.c.b16 %v292, %v291
    %v307 = vpack.c.b16 %v294, %v293
    %v308 = vpack.c.b16 %v296, %v295
    %v309 = vpack.c.b16 %v298, %v297
    %v310 = vpack.c.b16 %v300, %v299
    %v311 = vpack.c.b16 %v302, %v301
    %v312 = vpack.c.b16 %v304, %v303
    %321 = vmatprep.subr.bf16.mxu0 0
    %322 = vmatpush1.bf16.msra.mxu0 %v305
    %323 = vmatprep.subr.bf16.mxu0 0
    %324 = vmatpush1.bf16.msra.mxu0 %v306
    %325 = vmatprep.subr.bf16.mxu0 0
    %326 = vmatpush1.bf16.msra.mxu0 %v307
    %327 = vmatprep.subr.bf16.mxu0 0
    %328 = vmatpush1.bf16.msra.mxu0 %v308
    %329 = vmatprep.subr.bf16.mxu0 0
    %330 = vmatpush1.bf16.msra.mxu0 %v309
    %331 = vmatprep.subr.bf16.mxu0 0
    %332 = vmatpush1.bf16.msra.mxu0 %v310
    %333 = vmatprep.subr.bf16.mxu0 0
    %334 = vmatpush1.bf16.msra.mxu0 %v311
    %335 = vmatprep.subr.bf16.mxu0 0
    %336 = vmatpush1.bf16.msra.mxu0 %v312
    %337 = vmatprep.subr.bf16.mxu0 0
    %338 = vmatpush1.bf16.msra.mxu0 0
    %339 = vmatprep.subr.bf16.mxu0 0
    %340 = vmatpush1.bf16.msra.mxu0 0
    %341 = vmatprep.subr.bf16.mxu0 0
    %342 = vmatpush1.bf16.msra.mxu0 0
    %343 = vmatprep.subr.bf16.mxu0 0
    %344 = vmatpush1.bf16.msra.mxu0 0
    %345 = vmatprep.subr.bf16.mxu0 0
    %346 = vmatpush1.bf16.msra.mxu0 0
    %347 = vmatprep.subr.bf16.mxu0 0
    %348 = vmatpush1.bf16.msra.mxu0 0
    %349 = vmatprep.subr.bf16.mxu0 0
    %350 = vmatpush1.bf16.msra.mxu0 0
    %351 = vmatprep.subr.bf16.mxu0 0
    %352 = vmatpush1.bf16.msra.mxu0 0
    %353 = vmatprep.mubr.bf16.mxu0 0
    %354 = vmatmul.mubr.bf16.gmra.mrb[0].mxu0 %v249
    %v355 = vpop.f32.mrb[0].mxu0
    %v356 = vadd.f32 %v271, %v355
    %v357 = vpop.f32.mrb[0].mxu0
    %v358 = vpop.f32.mrb[0].mxu0
    %v359 = vadd.f32 %v271, %v358
    %v360 = vpop.f32.mrb[0].mxu0
    %361 = vdwg.mxu0
    %362 = vst [vmem:[#allocation14] sm:$0xff] %v356
    %363 = vst [vmem:[#allocation14 + $0x8] sm:$0xff] %v359
    // Predicated region
    $region58: #{tpu_custom_call.1} parent=1 // pred_check
      _
    $region59: #{tpu_custom_call.1} parent=1 // pred_check_branch
      %365 = sbr.rel (0) target = $region61
    $region60: #{tpu_custom_call.1} parent=1 // pred_region
      %s367 = ssub.s32 256, 256
      %368 = vsyncadd [#allocation4], %s367
      %s369 = sshll.u32 [#allocation14], 4
      %s370 = int_to_ptr.vmem [resolvable:$true] %s369
      %375 = dma.vmem_to_hbm [thread:$0]  %s370, 256, %s7, [#allocation4], 128, 128, 8
    $region61: #{tpu_custom_call.1} parent=1 // pred_fallthru
      _
    // Predicated region
    $region62: #{tpu_custom_call.1} parent=1 // pred_check
      _
    $region63: #{tpu_custom_call.1} parent=1 // pred_check_branch
      %377 = sbr.rel (0) target = $region65
    $region64: #{tpu_custom_call.1} parent=1 // pred_region
      %378 = dma.done [#allocation4], 256
    $region65: #{tpu_custom_call.1} parent=1 // pred_fallthru
      _
    %379 = vsyncpa [#allocation3], 1
    %380 = vsyncpa [#allocation6], 1
    %381 = vsyncpa [#allocation9], 1
    %382 = vsyncpa [#allocation12], 1
    %383 = vsyncpa [#allocation4], 1

</llo_original>
